<compile_context>
chip_gen: v5e
topology: v5e:2x2
jax: 0.10.0
libtpu: 0.0.40
codegen_flags: <defaults>
</compile_context>

<pallas_src>
import jax
import jax.numpy as jnp
from jax.experimental import pallas as pl
from jax.experimental.pallas import tpu as pltpu


def _idwt_haar_kernel(s_ref, low_ref, high_ref, out_ref):
    """One (batch, channel-block, H-tile) step.

    s_ref   : (2*CHUNK, 2*CHUNK)  constant 0.5-scaled column-interleave scatter
    low_ref : (1, TC, TH, W)      LL
    high_ref: (1, 3, TC, TH, W)   stacked [HL, LH, HH]
    out_ref : (1, TC, TH, 4W)     row-pair packed output:
              lanes [0, 2W)  == output row 2h, lanes [2W, 4W) == row 2h+1
    """
    _, tc, th, w = low_ref.shape
    chunk = s_ref.shape[0] // 2
    n_chunks = w // chunk
    w2 = 2 * w
    m = tc * th

    s_mat = s_ref[...]                       # resident, fetched once per step

    # Fold the channel block into the sublane axis: bigger VPU/MXU ops, no
    # per-channel unrolled loop.
    ll = low_ref[0].reshape(m, w)
    hl = high_ref[0, 0].reshape(m, w)
    lh = high_ref[0, 1].reshape(m, w)
    hh = high_ref[0, 2].reshape(m, w)

    # Haar synthesis butterfly; the 1/2 band scale is folded into s_mat.
    s12 = ll + hl
    d12 = ll - hl
    s34 = lh + hh
    d43 = hh - lh

    ee = d12 + d43   # -> out[2h,   2w]
    oe = d12 - d43   # -> out[2h+1, 2w]
    eo = s12 - s34   # -> out[2h,   2w+1]
    oo = s12 + s34   # -> out[2h+1, 2w+1]

    # Block-diagonal column interleave on the otherwise-idle MXU:
    # s_mat row i (<chunk)  -> output lane 2i   (scaled by 0.5)
    # s_mat row chunk+i     -> output lane 2i+1 (scaled by 0.5)
    for k in range(n_chunks):                # static chunk count
        lo, hi = k * chunk, (k + 1) * chunk
        top = jnp.dot(jnp.concatenate([ee[:, lo:hi], eo[:, lo:hi]], axis=1),
                      s_mat, preferred_element_type=jnp.float32)
        bot = jnp.dot(jnp.concatenate([oe[:, lo:hi], oo[:, lo:hi]], axis=1),
                      s_mat, preferred_element_type=jnp.float32)
        out_ref[0, :, :, 2 * lo:2 * hi] = (
            top.reshape(tc, th, 2 * chunk).astype(out_ref.dtype))
        out_ref[0, :, :, w2 + 2 * lo:w2 + 2 * hi] = (
            bot.reshape(tc, th, 2 * chunk).astype(out_ref.dtype))


def _scatter_matrix(chunk, dtype):
    """(2*chunk, 2*chunk) matrix: rows [0,chunk) -> even lanes, rows
    [chunk,2chunk) -> odd lanes, entries = 0.5 (Haar scale folded in)."""
    row = jnp.arange(2 * chunk)[:, None]
    col = jnp.arange(2 * chunk)[None, :]
    dest = jnp.where(row < chunk, 2 * row, 2 * (row - chunk) + 1)
    return jnp.where(col == dest, 0.5, 0.0).astype(dtype)


def _pick_tiles(C, H, W):
    """Choose (channel block, H tile) so the per-step working set stays small
    enough for double-buffered pipelining on all TPU generations."""
    budget = 128 * 1024  # elements per (TC, TH, W) band block (~0.5 MiB f32)
    th = H
    if H % 8 == 0:
        cands = [t for t in range(8, H + 1, 8) if H % t == 0]
        fit = [t for t in cands if t * W <= budget]
        th = max(fit) if fit else min(cands)
    tc = 1
    for t in range(C, 0, -1):
        if C % t == 0 and t * th * W <= budget:
            tc = t
            break
    return tc, th


def idwt_forward(low, high):
    """Pallas-backed forward of IDWTLayers (inverse Haar DWT).

    low : (B, C, H, W), high: (B, 3C, H, W) with channels [HL | LH | HH].
    Returns (B, C, 2H, 2W).
    """
    low = jnp.asarray(low)
    high = jnp.asarray(high)
    B, C, H, W = low.shape
    if high.shape != (B, 3 * C, H, W):
        raise ValueError(f"high must have shape {(B, 3 * C, H, W)}, got {high.shape}")

    # Free (contiguous) reshape: split the 3C channel axis into (band, C).
    high_bands = high.reshape(B, 3, C, H, W)

    # 128-lane chunks when W allows; otherwise one whole-W chunk.
    chunk = 128 if (W % 128 == 0) else W
    s_mat = _scatter_matrix(chunk, low.dtype)

    tc, th = _pick_tiles(C, H, W)
    grid = (B, C // tc, H // th)

    itemsize = jnp.dtype(low.dtype).itemsize
    blk_bytes = 8 * tc * th * W * itemsize           # in (4x) + out (4x) per step
    vmem_limit = int(min(56 * 1024 * 1024, max(32 * 1024 * 1024, 3 * blk_bytes)))

    out_packed = pl.pallas_call(
        _idwt_haar_kernel,
        out_shape=jax.ShapeDtypeStruct((B, C, H, 4 * W), low.dtype),
        grid=grid,
        in_specs=[
            # Constant scatter matrix: same block every step -> fetched once.
            pl.BlockSpec((2 * chunk, 2 * chunk), lambda b, c, h: (0, 0)),
            pl.BlockSpec((1, tc, th, W), lambda b, c, h: (b, c, h, 0)),
            pl.BlockSpec((1, 3, tc, th, W), lambda b, c, h: (b, 0, c, h, 0)),
        ],
        out_specs=pl.BlockSpec((1, tc, th, 4 * W), lambda b, c, h: (b, c, h, 0)),
        compiler_params=pltpu.CompilerParams(
            dimension_semantics=("parallel", "parallel", "parallel"),
            vmem_limit_bytes=vmem_limit),
    )(s_mat, low, high_bands)

    # (B, C, H, 4W) -> (B, C, 2H, 2W) is a contiguous, zero-copy reshape:
    # lanes [0,2W) of packed row h are output row 2h, lanes [2W,4W) row 2h+1.
    return out_packed.reshape(B, C, 2 * H, 2 * W)


# ---------------- pure-JAX references (for the self-test only) ----------------

def _haar_dwt_ref(x):
    a = x[:, :, 0::2, 0::2] / 2   # even row, even col
    b = x[:, :, 1::2, 0::2] / 2   # odd  row, even col
    c = x[:, :, 0::2, 1::2] / 2   # even row, odd  col
    d = x[:, :, 1::2, 1::2] / 2   # odd  row, odd  col
    ll = a + b + c + d
    hl = -a - b + c + d
    lh = -a + b - c + d
    hh = a - b - c + d
    return ll, jnp.concatenate([hl, lh, hh], axis=1)


def _haar_idwt_ref(low, high):
    B, C, H, W = low.shape
    x1 = low * 0.5
    x2 = high[:, 0:C] * 0.5
    x3 = high[:, C:2 * C] * 0.5
    x4 = high[:, 2 * C:3 * C] * 0.5
    out = jnp.zeros((B, C, 2 * H, 2 * W), low.dtype)
    out = out.at[:, :, 0::2, 0::2].set(x1 - x2 - x3 + x4)
    out = out.at[:, :, 1::2, 0::2].set(x1 - x2 + x3 - x4)
    out = out.at[:, :, 0::2, 1::2].set(x1 + x2 - x3 - x4)
    out = out.at[:, :, 1::2, 1::2].set(x1 + x2 + x3 + x4)
    return out


if __name__ == "__main__":
    # Small deterministic setup: low (2,4,16,16), high (2,12,16,16) -> out (2,4,32,32)
    B, C, H, W = 2, 4, 16, 16
    key = jax.random.PRNGKey(0)
    x = jax.random.normal(key, (B, C, 2 * H, 2 * W), dtype=jnp.float32)

    low, high = _haar_dwt_ref(x)

    recon = idwt_forward(low, high)
    recon = jax.block_until_ready(recon)

    ref = _haar_idwt_ref(low, high)
    assert recon.shape == (B, C, 2 * H, 2 * W), recon.shape
    assert jnp.allclose(recon, ref, atol=1e-5, rtol=1e-5), "mismatch vs pure-JAX IDWT"
    # Orthonormal Haar: IDWT(DWT(x)) must reconstruct x.
    assert jnp.allclose(recon, x, atol=1e-5, rtol=1e-5), "perfect reconstruction failed"
    print("KERNEL_OK")
</pallas_src>

<mosaic_0001>
module attributes {stable_mosaic.version = 11 : i64} {
  func.func @_idwt_haar_kernel(%arg0: i32, %arg1: i32, %arg2: i32, %arg3: memref<32x32xf32, #tpu.memory_space<vmem>>, %arg4: memref<1x4x16x16xf32, #tpu.memory_space<vmem>>, %arg5: memref<1x3x4x16x16xf32, #tpu.memory_space<vmem>>, %arg6: memref<1x4x16x64xf32, #tpu.memory_space<vmem>>) attributes {dimension_semantics = [#tpu.dimension_semantics<parallel>, #tpu.dimension_semantics<parallel>, #tpu.dimension_semantics<parallel>], iteration_bounds = array<i64: 2, 1, 1>, scalar_prefetch = 0 : i64, scratch_operands = 0 : i64, tpu.core_type = #tpu.core_type<tc>, window_params = [{pipeline_mode = #tpu.pipeline_mode<synchronous>, transform_indices = @transform_0, window_bounds = array<i64: 32, 32>}, {transform_indices = @transform_1, window_bounds = array<i64: 1, 4, 16, 16>}, {transform_indices = @transform_2, window_bounds = array<i64: 1, 3, 4, 16, 16>}, {transform_indices = @transform_3, window_bounds = array<i64: 1, 4, 16, 64>}]} {
    %c0 = arith.constant 0 : index
    %c0_0 = arith.constant 0 : index
    %0 = vector.load %arg3[%c0, %c0_0] : memref<32x32xf32, #tpu.memory_space<vmem>>, vector<32x32xf32>
    %c0_1 = arith.constant 0 : index
    %c0_2 = arith.constant 0 : index
    %c0_3 = arith.constant 0 : index
    %c0_4 = arith.constant 0 : index
    %1 = vector.load %arg4[%c0_1, %c0_2, %c0_3, %c0_4] : memref<1x4x16x16xf32, #tpu.memory_space<vmem>>, vector<1x4x16x16xf32>
    %2 = vector.shape_cast %1 : vector<1x4x16x16xf32> to vector<4x16x16xf32>
    %3 = vector.shape_cast %2 : vector<4x16x16xf32> to vector<64x16xf32>
    %c0_5 = arith.constant 0 : index
    %c0_6 = arith.constant 0 : index
    %c0_7 = arith.constant 0 : index
    %c0_8 = arith.constant 0 : index
    %c0_9 = arith.constant 0 : index
    %4 = vector.load %arg5[%c0_5, %c0_6, %c0_7, %c0_8, %c0_9] : memref<1x3x4x16x16xf32, #tpu.memory_space<vmem>>, vector<1x1x4x16x16xf32>
    %5 = vector.shape_cast %4 : vector<1x1x4x16x16xf32> to vector<4x16x16xf32>
    %6 = vector.shape_cast %5 : vector<4x16x16xf32> to vector<64x16xf32>
    %c0_10 = arith.constant 0 : index
    %c1 = arith.constant 1 : index
    %c0_11 = arith.constant 0 : index
    %c0_12 = arith.constant 0 : index
    %c0_13 = arith.constant 0 : index
    %7 = vector.load %arg5[%c0_10, %c1, %c0_11, %c0_12, %c0_13] : memref<1x3x4x16x16xf32, #tpu.memory_space<vmem>>, vector<1x1x4x16x16xf32>
    %8 = vector.shape_cast %7 : vector<1x1x4x16x16xf32> to vector<4x16x16xf32>
    %9 = vector.shape_cast %8 : vector<4x16x16xf32> to vector<64x16xf32>
    %c0_14 = arith.constant 0 : index
    %c2 = arith.constant 2 : index
    %c0_15 = arith.constant 0 : index
    %c0_16 = arith.constant 0 : index
    %c0_17 = arith.constant 0 : index
    %10 = vector.load %arg5[%c0_14, %c2, %c0_15, %c0_16, %c0_17] : memref<1x3x4x16x16xf32, #tpu.memory_space<vmem>>, vector<1x1x4x16x16xf32>
    %11 = vector.shape_cast %10 : vector<1x1x4x16x16xf32> to vector<4x16x16xf32>
    %12 = vector.shape_cast %11 : vector<4x16x16xf32> to vector<64x16xf32>
    %13 = arith.addf %3, %6 : vector<64x16xf32>
    %14 = arith.subf %3, %6 : vector<64x16xf32>
    %15 = arith.addf %9, %12 : vector<64x16xf32>
    %16 = arith.subf %12, %9 : vector<64x16xf32>
    %17 = arith.addf %14, %16 : vector<64x16xf32>
    %18 = arith.subf %14, %16 : vector<64x16xf32>
    %19 = arith.subf %13, %15 : vector<64x16xf32>
    %20 = arith.addf %13, %15 : vector<64x16xf32>
    %21 = tpu.concatenate %17, %19 in 1 : vector<64x16xf32>, vector<64x16xf32> -> vector<64x32xf32>
    %cst = arith.constant dense<0.000000e+00> : vector<64x32xf32>
    %22 = tpu.matmul %21, %0, %cst {dimension_numbers = #tpu.dot_dimension_numbers<[1], [0], [0], [1], [0, 0, 1, 1], [], []>} : vector<64x32xf32>, vector<32x32xf32>, vector<64x32xf32> -> vector<64x32xf32>
    %23 = tpu.concatenate %18, %20 in 1 : vector<64x16xf32>, vector<64x16xf32> -> vector<64x32xf32>
    %cst_18 = arith.constant dense<0.000000e+00> : vector<64x32xf32>
    %24 = tpu.matmul %23, %0, %cst_18 {dimension_numbers = #tpu.dot_dimension_numbers<[1], [0], [0], [1], [0, 0, 1, 1], [], []>} : vector<64x32xf32>, vector<32x32xf32>, vector<64x32xf32> -> vector<64x32xf32>
    %25 = vector.shape_cast %22 : vector<64x32xf32> to vector<4x16x32xf32>
    %c0_19 = arith.constant 0 : index
    %c0_20 = arith.constant 0 : index
    %c0_21 = arith.constant 0 : index
    %c0_22 = arith.constant 0 : index
    %26 = vector.load %arg6[%c0_19, %c0_20, %c0_21, %c0_22] : memref<1x4x16x64xf32, #tpu.memory_space<vmem>>, vector<1x4x16x32xf32>
    %27 = vector.shape_cast %26 : vector<1x4x16x32xf32> to vector<4x16x32xf32>
    %28 = vector.shape_cast %25 : vector<4x16x32xf32> to vector<1x4x16x32xf32>
    tpu.vector_store %arg6[%c0_19, %c0_20, %c0_21, %c0_22], %28 {strides = array<i32>} : memref<1x4x16x64xf32, #tpu.memory_space<vmem>>, vector<1x4x16x32xf32>,
    %29 = vector.shape_cast %24 : vector<64x32xf32> to vector<4x16x32xf32>
    %c0_23 = arith.constant 0 : index
    %c0_24 = arith.constant 0 : index
    %c0_25 = arith.constant 0 : index
    %c32 = arith.constant 32 : index
    %30 = vector.load %arg6[%c0_23, %c0_24, %c0_25, %c32] : memref<1x4x16x64xf32, #tpu.memory_space<vmem>>, vector<1x4x16x32xf32>
    %31 = vector.shape_cast %30 : vector<1x4x16x32xf32> to vector<4x16x32xf32>
    %32 = vector.shape_cast %29 : vector<4x16x32xf32> to vector<1x4x16x32xf32>
    tpu.vector_store %arg6[%c0_23, %c0_24, %c0_25, %c32], %32 {strides = array<i32>} : memref<1x4x16x64xf32, #tpu.memory_space<vmem>>, vector<1x4x16x32xf32>,
    return
  }
  func.func @transform_0(%arg0: i32, %arg1: i32, %arg2: i32) -> (i32, i32) {
    %c0_i32 = arith.constant 0 : i32
    %c0_i32_0 = arith.constant 0 : i32
    %c0_i32_1 = arith.constant 0 : i32
    return %c0_i32, %c0_i32_0 : i32, i32
  }
  func.func @transform_1(%arg0: i32, %arg1: i32, %arg2: i32) -> (i32, i32, i32, i32) {
    %c0_i32 = arith.constant 0 : i32
    %c0_i32_0 = arith.constant 0 : i32
    return %arg0, %arg1, %arg2, %c0_i32 : i32, i32, i32, i32
  }
  func.func @transform_2(%arg0: i32, %arg1: i32, %arg2: i32) -> (i32, i32, i32, i32, i32) {
    %c0_i32 = arith.constant 0 : i32
    %c0_i32_0 = arith.constant 0 : i32
    %c0_i32_1 = arith.constant 0 : i32
    return %arg0, %c0_i32, %arg1, %arg2, %c0_i32_0 : i32, i32, i32, i32, i32
  }
  func.func @transform_3(%arg0: i32, %arg1: i32, %arg2: i32) -> (i32, i32, i32, i32) {
    %c0_i32 = arith.constant 0 : i32
    %c0_i32_0 = arith.constant 0 : i32
    return %arg0, %arg1, %arg2, %c0_i32 : i32, i32, i32, i32
  }
}

</mosaic_0001>

<llo_original>
// kernel: tpu_custom_call.1
$region0: #{tpu_custom_call.1}
  #allocation0 [shape = 'u32[]', space=smem, size = 0x4, offset = 0x4, fixed_abs, tag = 'smem constant byte address 0x4 - core index']
  #allocation1 [shape = 'u32[72,128]{1,0:T(1,128)}', space=vmem, size = 0x9000, scoped, tag = 'internal scratch']
  %s0 = inlined_call_operand.hbm [shape: f32[32,32], index: 0, kind: input, shape index: {}]
  %s1 = inlined_call_operand.hbm [shape: f32[2,4,16,16], index: 1, kind: input, shape index: {}]
  %s2 = inlined_call_operand.hbm [shape: f32[2,3,4,16,16], index: 2, kind: input, shape index: {}]
  %s3 = inlined_call_operand.hbm [shape: f32[2,4,16,64], index: 3, kind: output, shape index: {}]
  %s4 = sld [smem:[#allocation0]]
  $region57: #{tpu_custom_call.1} parent=0
    _
  %s6 = ssub.s32 1, %s4
  %s7 = scalar_select 0, %s6, %s4
  $region1: #{tpu_custom_call.1} parent=0
    #allocation2 [shape = 'u8[16384]{0}', space=vmem, size = 0x4000, scoped, tag = 'input window, operand 0, single buffered']
    #allocation3 [shape = 's32[2]{0}', space=sflag, size = 0x8, scoped, tag = 'scoped memory for tpu_custom_call.1']
    #allocation4 [shape = 's32[2]{0}', space=sflag, size = 0x8, scoped, tag = 'scoped memory for tpu_custom_call.1']
    #allocation5 [shape = 'u8[65536]{0}', space=vmem, size = 0x10000, scoped, tag = 'input window, operand 1']
    #allocation6 [shape = 's32[2]{0}', space=sflag, size = 0x8, scoped, tag = 'scoped memory for tpu_custom_call.1']
    #allocation7 [shape = 'u8[196608]{0}', space=vmem, size = 0x30000, scoped, tag = 'input window, operand 2']
    #allocation8 [shape = 'u8[65536]{0}', space=vmem, size = 0x10000, scoped, tag = 'output window, operand 0']
    %8 = vsyncpa [#allocation3], 0
    %9 = vsyncpa [#allocation6], 0
    %s10 = scalar_lea.sflag [#allocation6], 1
    %11 = vsyncpa %s10, 0
    %12 = vsyncpa [#allocation4], 0
    %s13 = scalar_lea.sflag [#allocation4], 1
    %14 = vsyncpa %s13, 0
    loop: start=0, step=1, limit=4
    $region2: #{tpu_custom_call.1} parent=1 // loop_pre_header
      _
    $region3: #{tpu_custom_call.1} parent=1 // loop_header
      %s16 = sphi 0, %s20
      %p17 = scmp.ge.s32.totalorder %s16, 4
      %s23 = sphi 0, %s42
      %s24 = sphi 0, %s38
      %s25 = sphi 0, %s34
      %s26 = sphi 0, %s23
      %s27 = sphi 0, %s24
      %s28 = sphi 0, %s25
      %s29 = sphi 0, %s26
      %s30 = sphi 0, %s27
      %s31 = sphi 0, %s28
      %s43 = sphi 0, %s43
      %s45 = sphi 0, %s43
      %s46 = sphi 0, %s45
      %s60 = sphi 0, %s46
      %s70 = sphi 0, %s72
      %s73 = sphi 0, %s70
      %s74 = sphi 0, %s73
      %s90 = sphi 0, %s74
      %s100 = sphi 0, %s102
      %s103 = sphi 0, %s100
      %s104 = sphi 0, %s103
      %s120 = sphi 0, %s104
      %s130 = sphi 0, %s132
      %s133 = sphi 0, %s130
      %s134 = sphi 0, %s133
      %s150 = sphi 0, %s134
    $region4: #{tpu_custom_call.1} parent=1 // loop_header_branch
      %19 = sbr.rel (%p17) target = $region8
    $region5: #{tpu_custom_call.1} parent=1 // loop_body
      %s21 = ssub.s32 %s16, 1
      %s22 = ssub.s32 %s16, 2
      %s32 = sadd.s32 1, %s25
      %p33 = scmp.ge.s32.totalorder %s32, 1
      %s34 = scalar_select %p33, 0, %s32
      %s35 = sadd.s32 1, %s24
      %s36 = scalar_select %p33, %s35, %s24
      %p37 = scmp.ge.s32.totalorder %s36, 1
      %s38 = scalar_select %p37, 0, %s36
      %s39 = sadd.s32 1, %s23
      %s40 = scalar_select %p37, %s39, %s23
      %p41 = scmp.ge.s32.totalorder %s40, 2
      %s42 = scalar_select %p41, 0, %s40
      %s44 = sadd.s32 %s43, 1
      %p47 = scmp.eq.s32.totalorder %s16, 1
      %p48 = scmp.ne.s32.totalorder %s43, %s45
      %p49 = scmp.eq.s32.totalorder %s16, 0
      %p50 = por %p48, %p49
      %p51 = scmp.ne.s32.totalorder %s43, %s45
      %p52 = scmp.eq.s32.totalorder %s21, 1
      %p53 = por %p51, %p52
      %p54 = scmp.ne.s32.totalorder %s45, %s46
      %p55 = scmp.eq.s32.totalorder %s21, 0
      %p56 = por %p54, %p55
      %p57 = scmp.ne.s32.totalorder %s45, %s46
      %p58 = scmp.eq.s32.totalorder %s22, 1
      %p59 = por %p57, %p58
      %p61 = scmp.ne.s32.totalorder %s46, %s60
      %p62 = scmp.eq.s32.totalorder %s22, 0
      %p63 = por %p61, %p62
      %s64 = ssub.s32 %s23, %s42
      %s65 = ssub.s32 %s24, %s38
      %s66 = sor.u32 %s64, %s65
      %s67 = ssub.s32 %s25, %s34
      %s68 = sor.u32 %s66, %s67
      %p69 = scmp.eq.s32.totalorder %s68, 0
      %s71 = sadd.s32 %s70, 1
      %s72 = scalar_select %p69, %s70, %s71
      %p75 = pneg %p69
      %p76 = scmp.eq.s32.totalorder %s16, 1
      %p77 = por %p75, %p76
      %p78 = scmp.ne.s32.totalorder %s70, %s73
      %p79 = scmp.eq.s32.totalorder %s16, 0
      %p80 = por %p78, %p79
      %p81 = scmp.ne.s32.totalorder %s70, %s73
      %p82 = scmp.eq.s32.totalorder %s21, 1
      %p83 = por %p81, %p82
      %p84 = scmp.ne.s32.totalorder %s73, %s74
      %p85 = scmp.eq.s32.totalorder %s21, 0
      %p86 = por %p84, %p85
      %p87 = scmp.ne.s32.totalorder %s73, %s74
      %p88 = scmp.eq.s32.totalorder %s22, 1
      %p89 = por %p87, %p88
      %p91 = scmp.ne.s32.totalorder %s74, %s90
      %p92 = scmp.eq.s32.totalorder %s22, 0
      %p93 = por %p91, %p92
      %s94 = ssub.s32 %s23, %s42
      %s95 = ssub.s32 %s24, %s38
      %s96 = sor.u32 %s94, %s95
      %s97 = ssub.s32 %s25, %s34
      %s98 = sor.u32 %s96, %s97
      %p99 = scmp.eq.s32.totalorder %s98, 0
      %s101 = sadd.s32 %s100, 1
      %s102 = scalar_select %p99, %s100, %s101
      %p105 = pneg %p99
      %p106 = scmp.eq.s32.totalorder %s16, 1
      %p107 = por %p105, %p106
      %p108 = scmp.ne.s32.totalorder %s100, %s103
      %p109 = scmp.eq.s32.totalorder %s16, 0
      %p110 = por %p108, %p109
      %p111 = scmp.ne.s32.totalorder %s100, %s103
      %p112 = scmp.eq.s32.totalorder %s21, 1
      %p113 = por %p111, %p112
      %p114 = scmp.ne.s32.totalorder %s103, %s104
      %p115 = scmp.eq.s32.totalorder %s21, 0
      %p116 = por %p114, %p115
      %p117 = scmp.ne.s32.totalorder %s103, %s104
      %p118 = scmp.eq.s32.totalorder %s22, 1
      %p119 = por %p117, %p118
      %p121 = scmp.ne.s32.totalorder %s104, %s120
      %p122 = scmp.eq.s32.totalorder %s22, 0
      %p123 = por %p121, %p122
      %s124 = ssub.s32 %s23, %s42
      %s125 = ssub.s32 %s24, %s38
      %s126 = sor.u32 %s124, %s125
      %s127 = ssub.s32 %s25, %s34
      %s128 = sor.u32 %s126, %s127
      %p129 = scmp.eq.s32.totalorder %s128, 0
      %s131 = sadd.s32 %s130, 1
      %s132 = scalar_select %p129, %s130, %s131
      %p135 = pneg %p129
      %p136 = scmp.eq.s32.totalorder %s16, 1
      %p137 = por %p135, %p136
      %p138 = scmp.ne.s32.totalorder %s130, %s133
      %p139 = scmp.eq.s32.totalorder %s16, 0
      %p140 = por %p138, %p139
      %p141 = scmp.ne.s32.totalorder %s130, %s133
      %p142 = scmp.eq.s32.totalorder %s21, 1
      %p143 = por %p141, %p142
      %p144 = scmp.ne.s32.totalorder %s133, %s134
      %p145 = scmp.eq.s32.totalorder %s21, 0
      %p146 = por %p144, %p145
      %p147 = scmp.ne.s32.totalorder %s133, %s134
      %p148 = scmp.eq.s32.totalorder %s22, 1
      %p149 = por %p147, %p148
      %p151 = scmp.ne.s32.totalorder %s134, %s150
      %p152 = scmp.eq.s32.totalorder %s22, 0
      %p153 = por %p151, %p152
      %p154 = scmp.le.s32.totalorder 1, %s16
      %p155 = scmp.lt.s32.totalorder %s16, 3
      %p156 = pnand %p154, %p155
      %p157 = pneg %p156
      // Predicated region
      $region9: #{tpu_custom_call.1} parent=5 // pred_check
        _
      $region10: #{tpu_custom_call.1} parent=5 // pred_check_branch
        %159 = sbr.rel (%p156) target = $region12
      $region11: #{tpu_custom_call.1} parent=5 // pred_region
        %s160 = ssub.s32 %s16, 1
        // Predicated region
        $region13: #{tpu_custom_call.1} parent=11 // pred_check
          %p161 = pneg %p56
        $region14: #{tpu_custom_call.1} parent=11 // pred_check_branch
          %163 = sbr.rel (%p161) target = $region16
        $region15: #{tpu_custom_call.1} parent=11 // pred_region
          %165 = vsyncadd [#allocation3], 0
          %s166 = sshll.u32 %s0, 4
          %s167 = int_to_ptr.hbm [resolvable:$true] %s166
          %s168 = sshll.u32 [#allocation2], 4
          %s169 = int_to_ptr.vmem [resolvable:$true] %s168
          %174 = dma.hbm_to_vmem [thread:$0]  %s167, 512, %s169, [#allocation3], 128, 128, 8
        $region16: #{tpu_custom_call.1} parent=11 // pred_fallthru
          _
      $region12: #{tpu_custom_call.1} parent=5 // pred_fallthru
        _
      %p175 = scmp.lt.s32.totalorder %s16, 2
      // Predicated region
      $region17: #{tpu_custom_call.1} parent=5 // pred_check
        %p176 = pneg %p175
      $region18: #{tpu_custom_call.1} parent=5 // pred_check_branch
        %178 = sbr.rel (%p176) target = $region20
      $region19: #{tpu_custom_call.1} parent=5 // pred_region
        // Predicated region
        $region21: #{tpu_custom_call.1} parent=19 // pred_check
          %p179 = pneg %p80
        $region22: #{tpu_custom_call.1} parent=19 // pred_check_branch
          %181 = sbr.rel (%p179) target = $region24
        $region23: #{tpu_custom_call.1} parent=19 // pred_region
          %s182 = sand.u32 %s16, 1
          %s183 = scalar_lea.sflag [#allocation6], %s182
          %s184 = sand.u32 %s70, 1
          %s185 = smul.addr %s184, 64
          %s186 = scalar_lea.vmem [#allocation5], %s185
          %s187 = smul.u32 4, %s24
          %s188 = smul.u32 2, %s25
          %190 = vsyncadd %s183, 0
          %s191 = smul.addr %s187, 2
          %s192 = sadd.s32 %s188, %s191
          %s193 = smul.addr %s23, 8
          %s194 = sadd.s32 %s192, %s193
          %s195 = smul.addr %s194, 8
          %s196 = scalar_lea.hbm %s1, %s195
          %s197 = sshll.u32 %s196, 4
          %s198 = int_to_ptr.hbm [resolvable:$true] %s197
          %s199 = sshll.u32 %s186, 4
          %s200 = int_to_ptr.vmem [resolvable:$true] %s199
          %205 = dma.hbm_to_vmem [thread:$0]  %s198, 1024, %s200, %s183, 128, 128, 8
        $region24: #{tpu_custom_call.1} parent=19 // pred_fallthru
          _
        // Predicated region
        $region25: #{tpu_custom_call.1} parent=19 // pred_check
          %p206 = pneg %p110
        $region26: #{tpu_custom_call.1} parent=19 // pred_check_branch
          %208 = sbr.rel (%p206) target = $region28
        $region27: #{tpu_custom_call.1} parent=19 // pred_region
          %s209 = sand.u32 %s16, 1
          %s210 = scalar_lea.sflag [#allocation6], %s209
          %s211 = sand.u32 %s100, 1
          %s212 = smul.addr %s211, 192
          %s213 = scalar_lea.vmem [#allocation7], %s212
          %s214 = smul.u32 4, %s24
          %s215 = smul.u32 2, %s25
          %217 = vsyncadd %s210, 0
          %s218 = smul.addr %s214, 2
          %s219 = sadd.s32 %s215, %s218
          %s220 = smul.addr %s23, 24
          %s221 = sadd.s32 %s219, %s220
          %s222 = smul.addr %s221, 8
          %s223 = scalar_lea.hbm %s2, %s222
          %s224 = sshll.u32 %s223, 4
          %s225 = int_to_ptr.hbm [resolvable:$true] %s224
          %s226 = sshll.u32 %s213, 4
          %s227 = int_to_ptr.vmem [resolvable:$true] %s226
          %232 = dma.hbm_to_vmem [thread:$0]  %s225, 3072, %s227, %s210, 128, 128, 8
        $region28: #{tpu_custom_call.1} parent=19 // pred_fallthru
          _
      $region20: #{tpu_custom_call.1} parent=5 // pred_fallthru
        _
      %p233 = scmp.le.s32.totalorder 1, %s16
      %p234 = scmp.lt.s32.totalorder %s16, 3
      %p235 = pnand %p233, %p234
      %p236 = pneg %p235
      // Predicated region
      $region29: #{tpu_custom_call.1} parent=5 // pred_check
        _
      $region30: #{tpu_custom_call.1} parent=5 // pred_check_branch
        %238 = sbr.rel (%p235) target = $region32
      $region31: #{tpu_custom_call.1} parent=5 // pred_region
        %s239 = ssub.s32 %s16, 1
        // Predicated region
        $region33: #{tpu_custom_call.1} parent=31 // pred_check
          %p240 = pneg %p56
        $region34: #{tpu_custom_call.1} parent=31 // pred_check_branch
          %242 = sbr.rel (%p240) target = $region36
        $region35: #{tpu_custom_call.1} parent=31 // pred_region
          %244 = dma.done [#allocation3], 512
        $region36: #{tpu_custom_call.1} parent=31 // pred_fallthru
          _
        %s245 = sand.u32 %s21, 1
        %s246 = scalar_lea.sflag [#allocation6], %s245
        %s247 = sand.u32 %s73, 1
        %s248 = smul.addr %s247, 64
        %s249 = scalar_lea.vmem [#allocation5], %s248
        // Predicated region
        $region37: #{tpu_custom_call.1} parent=31 // pred_check
          %p250 = pneg %p86
        $region38: #{tpu_custom_call.1} parent=31 // pred_check_branch
          %252 = sbr.rel (%p250) target = $region40
        $region39: #{tpu_custom_call.1} parent=31 // pred_region
          %254 = dma.done %s246, 1024
        $region40: #{tpu_custom_call.1} parent=31 // pred_fallthru
          _
        %s255 = sand.u32 %s21, 1
        %s256 = scalar_lea.sflag [#allocation6], %s255
        %s257 = sand.u32 %s103, 1
        %s258 = smul.addr %s257, 192
        %s259 = scalar_lea.vmem [#allocation7], %s258
        // Predicated region
        $region41: #{tpu_custom_call.1} parent=31 // pred_check
          %p260 = pneg %p116
        $region42: #{tpu_custom_call.1} parent=31 // pred_check_branch
          %262 = sbr.rel (%p260) target = $region44
        $region43: #{tpu_custom_call.1} parent=31 // pred_region
          %264 = dma.done %s256, 3072
        $region44: #{tpu_custom_call.1} parent=31 // pred_fallthru
          _
        %p265 = pneg %p56
        %p266 = pneg %p53
        %s267 = sand.u32 %s21, 1
        %s268 = scalar_lea.sflag [#allocation6], %s267
        %s269 = sand.u32 %s73, 1
        %s270 = smul.addr %s269, 64
        %s271 = scalar_lea.vmem [#allocation5], %s270
        %p272 = pneg %p86
        %p273 = pneg %p83
        %s274 = sand.u32 %s21, 1
        %s275 = scalar_lea.sflag [#allocation6], %s274
        %s276 = sand.u32 %s103, 1
        %s277 = smul.addr %s276, 192
        %s278 = scalar_lea.vmem [#allocation7], %s277
        %p279 = pneg %p116
        %p280 = pneg %p113
        %p281 = pneg %p146
        %p282 = pneg %p143
        %s283 = sand.u32 %s133, 1
        %s284 = scalar_lea.sflag [#allocation4], %s283
        %s285 = sand.u32 %s133, 1
        %s286 = smul.addr %s285, 64
        %s287 = scalar_lea.vmem [#allocation8], %s286
        %s288 = smul.u32 4, %s27
        %s289 = smul.u32 2, %s28
        %s290 = smul.u32 4, %s27
        %s291 = smul.u32 2, %s28
        %s292 = smul.u32 4, %s27
        %s293 = smul.u32 2, %s28
        %v294 = vld [vmem:[#allocation2] sm:$0xff]
        %v295 = vld [vmem:[#allocation2 + $0x8] sm:$0xff]
        %v296 = vld [vmem:[#allocation2 + $0x10] sm:$0xff]
        %v297 = vld [vmem:[#allocation2 + $0x18] sm:$0xff]
        %v298 = vld [vmem:[%s249] sm:$0xff]
        %v299 = vld [vmem:[%s249 + $0x8] sm:$0xff]
        %v300 = vld [vmem:[%s249 + $0x10] sm:$0xff]
        %v301 = vld [vmem:[%s249 + $0x18] sm:$0xff]
        %v302 = vld [vmem:[%s249 + $0x20] sm:$0xff]
        %v303 = vld [vmem:[%s249 + $0x28] sm:$0xff]
        %v304 = vld [vmem:[%s249 + $0x30] sm:$0xff]
        %v305 = vld [vmem:[%s249 + $0x38] sm:$0xff]
        %v306 = vld [vmem:[%s259] sm:$0xff]
        %v307 = vld [vmem:[%s259 + $0x8] sm:$0xff]
        %v308 = vld [vmem:[%s259 + $0x10] sm:$0xff]
        %v309 = vld [vmem:[%s259 + $0x18] sm:$0xff]
        %v310 = vld [vmem:[%s259 + $0x20] sm:$0xff]
        %v311 = vld [vmem:[%s259 + $0x28] sm:$0xff]
        %v312 = vld [vmem:[%s259 + $0x30] sm:$0xff]
        %v313 = vld [vmem:[%s259 + $0x38] sm:$0xff]
        %s314 = scalar_lea.vmem %s259, 64 [#allocation7]
        %v315 = vld [vmem:[%s314] sm:$0xff]
        %v316 = vld [vmem:[%s314 + $0x8] sm:$0xff]
        %v317 = vld [vmem:[%s314 + $0x10] sm:$0xff]
        %v318 = vld [vmem:[%s314 + $0x18] sm:$0xff]
        %v319 = vld [vmem:[%s314 + $0x20] sm:$0xff]
        %v320 = vld [vmem:[%s314 + $0x28] sm:$0xff]
        %v321 = vld [vmem:[%s314 + $0x30] sm:$0xff]
        %v322 = vld [vmem:[%s314 + $0x38] sm:$0xff]
        %s323 = scalar_lea.vmem %s259, 128 [#allocation7]
        %v324 = vld [vmem:[%s323] sm:$0xff]
        %v325 = vld [vmem:[%s323 + $0x8] sm:$0xff]
        %v326 = vld [vmem:[%s323 + $0x10] sm:$0xff]
        %v327 = vld [vmem:[%s323 + $0x18] sm:$0xff]
        %v328 = vld [vmem:[%s323 + $0x20] sm:$0xff]
        %v329 = vld [vmem:[%s323 + $0x28] sm:$0xff]
        %v330 = vld [vmem:[%s323 + $0x30] sm:$0xff]
        %v331 = vld [vmem:[%s323 + $0x38] sm:$0xff]
        %v332 = vadd.f32 %v298, %v306
        %v333 = vadd.f32 %v299, %v307
        %v334 = vadd.f32 %v300, %v308
        %v335 = vadd.f32 %v301, %v309
        %v336 = vadd.f32 %v302, %v310
        %v337 = vadd.f32 %v303, %v311
        %v338 = vadd.f32 %v304, %v312
        %v339 = vadd.f32 %v305, %v313
        %v340 = vsub.f32 %v298, %v306
        %v341 = vsub.f32 %v299, %v307
        %v342 = vsub.f32 %v300, %v308
        %v343 = vsub.f32 %v301, %v309
        %v344 = vsub.f32 %v302, %v310
        %v345 = vsub.f32 %v303, %v311
        %v346 = vsub.f32 %v304, %v312
        %v347 = vsub.f32 %v305, %v313
        %v348 = vadd.f32 %v315, %v324
        %v349 = vadd.f32 %v316, %v325
        %v350 = vadd.f32 %v317, %v326
        %v351 = vadd.f32 %v318, %v327
        %v352 = vadd.f32 %v319, %v328
        %v353 = vadd.f32 %v320, %v329
        %v354 = vadd.f32 %v321, %v330
        %v355 = vadd.f32 %v322, %v331
        %v356 = vsub.f32 %v324, %v315
        %v357 = vsub.f32 %v325, %v316
        %v358 = vsub.f32 %v326, %v317
        %v359 = vsub.f32 %v327, %v318
        %v360 = vsub.f32 %v328, %v319
        %v361 = vsub.f32 %v329, %v320
        %v362 = vsub.f32 %v330, %v321
        %v363 = vsub.f32 %v331, %v322
        %v364 = vadd.f32 %v340, %v356
        %v365 = vadd.f32 %v341, %v357
        %v366 = vadd.f32 %v342, %v358
        %v367 = vadd.f32 %v343, %v359
        %v368 = vadd.f32 %v344, %v360
        %v369 = vadd.f32 %v345, %v361
        %v370 = vadd.f32 %v346, %v362
        %v371 = vadd.f32 %v347, %v363
        %v372 = vsub.f32 %v340, %v356
        %v373 = vsub.f32 %v341, %v357
        %v374 = vsub.f32 %v342, %v358
        %v375 = vsub.f32 %v343, %v359
        %v376 = vsub.f32 %v344, %v360
        %v377 = vsub.f32 %v345, %v361
        %v378 = vsub.f32 %v346, %v362
        %v379 = vsub.f32 %v347, %v363
        %v380 = vsub.f32 %v332, %v348
        %v381 = vsub.f32 %v333, %v349
        %v382 = vsub.f32 %v334, %v350
        %v383 = vsub.f32 %v335, %v351
        %v384 = vsub.f32 %v336, %v352
        %v385 = vsub.f32 %v337, %v353
        %v386 = vsub.f32 %v338, %v354
        %v387 = vsub.f32 %v339, %v355
        %v388 = vadd.f32 %v332, %v348
        %v389 = vadd.f32 %v333, %v349
        %v390 = vadd.f32 %v334, %v350
        %v391 = vadd.f32 %v335, %v351
        %v392 = vadd.f32 %v336, %v352
        %v393 = vadd.f32 %v337, %v353
        %v394 = vadd.f32 %v338, %v354
        %v395 = vadd.f32 %v339, %v355
        %404 = vrot.lane.b32.xlu0 %v380, 16
        %v405 = vpop.permute.xlu0 %404
        %406 = vrot.lane.b32.xlu0 %v381, 16
        %v407 = vpop.permute.xlu0 %406
        %408 = vrot.lane.b32.xlu0 %v382, 16
        %v409 = vpop.permute.xlu0 %408
        %410 = vrot.lane.b32.xlu0 %v383, 16
        %v411 = vpop.permute.xlu0 %410
        %412 = vrot.lane.b32.xlu0 %v384, 16
        %v413 = vpop.permute.xlu0 %412
        %414 = vrot.lane.b32.xlu0 %v385, 16
        %v415 = vpop.permute.xlu0 %414
        %416 = vrot.lane.b32.xlu0 %v386, 16
        %v417 = vpop.permute.xlu0 %416
        %418 = vrot.lane.b32.xlu0 %v387, 16
        %v419 = vpop.permute.xlu0 %418
        %vm428 = vcmask 130048
        %v429 = vsel %vm428, %v364, %v405
        %v430 = vsel %vm428, %v365, %v407
        %v431 = vsel %vm428, %v366, %v409
        %v432 = vsel %vm428, %v367, %v411
        %v433 = vsel %vm428, %v368, %v413
        %v434 = vsel %vm428, %v369, %v415
        %v435 = vsel %vm428, %v370, %v417
        %v436 = vsel %vm428, %v371, %v419
        %vm437 = vcmask 261120
        %v439 = vsel %vm437, %v429, 0
        %v442 = vsel %vm437, %v430, 0
        %v445 = vsel %vm437, %v431, 0
        %v448 = vsel %vm437, %v432, 0
        %v451 = vsel %vm437, %v433, 0
        %v454 = vsel %vm437, %v434, 0
        %v457 = vsel %vm437, %v435, 0
        %v460 = vsel %vm437, %v436, 0
        %462 = vmatpush.msra.mxu0 0.0
        %463 = vmatpush.msra.mxu0 0.0
        %464 = vmatpush.msra.mxu0 0.0
        %465 = vmatpush.msra.mxu0 0.0
        %466 = vmatpush.msra.mxu0 0.0
        %467 = vmatpush.msra.mxu0 0.0
        %468 = vmatpush.msra.mxu0 0.0
        %469 = vmatpush.msra.mxu0 0.0
        %470 = vmatpush.msra.mxu0 0.0
        %471 = vmatpush.msra.mxu0 0.0
        %472 = vmatpush.msra.mxu0 0.0
        %473 = vmatpush.msra.mxu0 0.0
        %474 = vmatpush.msra.mxu0 %v297
        %475 = vmatpush.msra.mxu0 %v296
        %476 = vmatpush.msra.mxu0 %v295
        %477 = vmatpush.msra.mxu0 %v294
        %478 = vmatmul.f32.gmra.mxu0 %v439
        %v479 = vpop.f32.mrf.mxu0
        %v480 = vadd.f32 0.0, %v479
        %481 = vmatmul.f32.gmra.mxu0 %v442
        %v482 = vpop.f32.mrf.mxu0
        %v483 = vadd.f32 0.0, %v482
        %484 = vmatmul.f32.gmra.mxu0 %v445
        %v485 = vpop.f32.mrf.mxu0
        %v486 = vadd.f32 0.0, %v485
        %487 = vmatmul.f32.gmra.mxu0 %v448
        %v488 = vpop.f32.mrf.mxu0
        %v489 = vadd.f32 0.0, %v488
        %490 = vmatmul.f32.gmra.mxu0 %v451
        %v491 = vpop.f32.mrf.mxu0
        %v492 = vadd.f32 0.0, %v491
        %493 = vmatmul.f32.gmra.mxu0 %v454
        %v494 = vpop.f32.mrf.mxu0
        %v495 = vadd.f32 0.0, %v494
        %496 = vmatmul.f32.gmra.mxu0 %v457
        %v497 = vpop.f32.mrf.mxu0
        %v498 = vadd.f32 0.0, %v497
        %499 = vmatmul.f32.gmra.mxu0 %v460
        %v500 = vpop.f32.mrf.mxu0
        %v501 = vadd.f32 0.0, %v500
        %502 = vdwg.mxu0
        %511 = vrot.lane.b32.xlu0 %v388, 16
        %v512 = vpop.permute.xlu0 %511
        %513 = vrot.lane.b32.xlu0 %v389, 16
        %v514 = vpop.permute.xlu0 %513
        %515 = vrot.lane.b32.xlu0 %v390, 16
        %v516 = vpop.permute.xlu0 %515
        %517 = vrot.lane.b32.xlu0 %v391, 16
        %v518 = vpop.permute.xlu0 %517
        %519 = vrot.lane.b32.xlu0 %v392, 16
        %v520 = vpop.permute.xlu0 %519
        %521 = vrot.lane.b32.xlu0 %v393, 16
        %v522 = vpop.permute.xlu0 %521
        %523 = vrot.lane.b32.xlu0 %v394, 16
        %v524 = vpop.permute.xlu0 %523
        %525 = vrot.lane.b32.xlu0 %v395, 16
        %v526 = vpop.permute.xlu0 %525
        %v535 = vsel %vm428, %v372, %v512
        %v536 = vsel %vm428, %v373, %v514
        %v537 = vsel %vm428, %v374, %v516
        %v538 = vsel %vm428, %v375, %v518
        %v539 = vsel %vm428, %v376, %v520
        %v540 = vsel %vm428, %v377, %v522
        %v541 = vsel %vm428, %v378, %v524
        %v542 = vsel %vm428, %v379, %v526
        %v544 = vsel %vm437, %v535, 0
        %v547 = vsel %vm437, %v536, 0
        %v550 = vsel %vm437, %v537, 0
        %v553 = vsel %vm437, %v538, 0
        %v556 = vsel %vm437, %v539, 0
        %v559 = vsel %vm437, %v540, 0
        %v562 = vsel %vm437, %v541, 0
        %v565 = vsel %vm437, %v542, 0
        %567 = vmatpush.msra.mxu0 0.0
        %568 = vmatpush.msra.mxu0 0.0
        %569 = vmatpush.msra.mxu0 0.0
        %570 = vmatpush.msra.mxu0 0.0
        %571 = vmatpush.msra.mxu0 0.0
        %572 = vmatpush.msra.mxu0 0.0
        %573 = vmatpush.msra.mxu0 0.0
        %574 = vmatpush.msra.mxu0 0.0
        %575 = vmatpush.msra.mxu0 0.0
        %576 = vmatpush.msra.mxu0 0.0
        %577 = vmatpush.msra.mxu0 0.0
        %578 = vmatpush.msra.mxu0 0.0
        %579 = vmatpush.msra.mxu0 %v297
        %580 = vmatpush.msra.mxu0 %v296
        %581 = vmatpush.msra.mxu0 %v295
        %582 = vmatpush.msra.mxu0 %v294
        %583 = vmatmul.f32.gmra.mxu0 %v544
        %v584 = vpop.f32.mrf.mxu0
        %v585 = vadd.f32 0.0, %v584
        %586 = vmatmul.f32.gmra.mxu0 %v547
        %v587 = vpop.f32.mrf.mxu0
        %v588 = vadd.f32 0.0, %v587
        %589 = vmatmul.f32.gmra.mxu0 %v550
        %v590 = vpop.f32.mrf.mxu0
        %v591 = vadd.f32 0.0, %v590
        %592 = vmatmul.f32.gmra.mxu0 %v553
        %v593 = vpop.f32.mrf.mxu0
        %v594 = vadd.f32 0.0, %v593
        %595 = vmatmul.f32.gmra.mxu0 %v556
        %v596 = vpop.f32.mrf.mxu0
        %v597 = vadd.f32 0.0, %v596
        %598 = vmatmul.f32.gmra.mxu0 %v559
        %v599 = vpop.f32.mrf.mxu0
        %v600 = vadd.f32 0.0, %v599
        %601 = vmatmul.f32.gmra.mxu0 %v562
        %v602 = vpop.f32.mrf.mxu0
        %v603 = vadd.f32 0.0, %v602
        %604 = vmatmul.f32.gmra.mxu0 %v565
        %v605 = vpop.f32.mrf.mxu0
        %v606 = vadd.f32 0.0, %v605
        %607 = vdwg.mxu0
        %608 = vst.msk [vmem:[%s287] sm:$0xff] %vm437, %v480
        %609 = vst.msk [vmem:[%s287 + $0x8] sm:$0xff] %vm437, %v483
        %610 = vst.msk [vmem:[%s287 + $0x10] sm:$0xff] %vm437, %v486
        %611 = vst.msk [vmem:[%s287 + $0x18] sm:$0xff] %vm437, %v489
        %612 = vst.msk [vmem:[%s287 + $0x20] sm:$0xff] %vm437, %v492
        %613 = vst.msk [vmem:[%s287 + $0x28] sm:$0xff] %vm437, %v495
        %614 = vst.msk [vmem:[%s287 + $0x30] sm:$0xff] %vm437, %v498
        %615 = vst.msk [vmem:[%s287 + $0x38] sm:$0xff] %vm437, %v501
        %624 = vrot.lane.b32.xlu0 %v585, 32
        %v625 = vpop.permute.xlu0 %624
        %626 = vrot.lane.b32.xlu0 %v588, 32
        %v627 = vpop.permute.xlu0 %626
        %628 = vrot.lane.b32.xlu0 %v591, 32
        %v629 = vpop.permute.xlu0 %628
        %630 = vrot.lane.b32.xlu0 %v594, 32
        %v631 = vpop.permute.xlu0 %630
        %632 = vrot.lane.b32.xlu0 %v597, 32
        %v633 = vpop.permute.xlu0 %632
        %634 = vrot.lane.b32.xlu0 %v600, 32
        %v635 = vpop.permute.xlu0 %634
        %636 = vrot.lane.b32.xlu0 %v603, 32
        %v637 = vpop.permute.xlu0 %636
        %638 = vrot.lane.b32.xlu0 %v606, 32
        %v639 = vpop.permute.xlu0 %638
        %vm648 = vcmask 523520
        %649 = vst.msk [vmem:[%s287] sm:$0xff] %vm648, %v625
        %650 = vst.msk [vmem:[%s287 + $0x8] sm:$0xff] %vm648, %v627
        %651 = vst.msk [vmem:[%s287 + $0x10] sm:$0xff] %vm648, %v629
        %652 = vst.msk [vmem:[%s287 + $0x18] sm:$0xff] %vm648, %v631
        %653 = vst.msk [vmem:[%s287 + $0x20] sm:$0xff] %vm648, %v633
        %654 = vst.msk [vmem:[%s287 + $0x28] sm:$0xff] %vm648, %v635
        %655 = vst.msk [vmem:[%s287 + $0x30] sm:$0xff] %vm648, %v637
        %656 = vst.msk [vmem:[%s287 + $0x38] sm:$0xff] %vm648, %v639
        %s657 = sand.u32 %s133, 1
        %s658 = scalar_lea.sflag [#allocation4], %s657
        %s659 = sand.u32 %s133, 1
        %s660 = smul.addr %s659, 64
        %s661 = scalar_lea.vmem [#allocation8], %s660
        // Predicated region
        $region45: #{tpu_custom_call.1} parent=31 // pred_check
          %p662 = pneg %p143
        $region46: #{tpu_custom_call.1} parent=31 // pred_check_branch
          %664 = sbr.rel (%p662) target = $region48
        $region47: #{tpu_custom_call.1} parent=31 // pred_region
          %s665 = smul.u32 4, %s27
          %s666 = smul.u32 2, %s28
          %668 = vsyncadd %s658, 0
          %s669 = smul.addr %s665, 2
          %s670 = sadd.s32 %s666, %s669
          %s671 = smul.addr %s26, 8
          %s672 = sadd.s32 %s670, %s671
          %s673 = smul.addr %s672, 8
          %s674 = scalar_lea.hbm %s3, %s673
          %s675 = sshll.u32 %s661, 4
          %s676 = int_to_ptr.vmem [resolvable:$true] %s675
          %s677 = sshll.u32 %s674, 4
          %s678 = int_to_ptr.hbm [resolvable:$true] %s677
          %683 = dma.vmem_to_hbm [thread:$0]  %s676, 1024, %s678, %s658, 128, 128, 8
        $region48: #{tpu_custom_call.1} parent=31 // pred_fallthru
          _
      $region32: #{tpu_custom_call.1} parent=5 // pred_fallthru
        _
      %p684 = scmp.le.s32.totalorder 2, %s16
      // Predicated region
      $region49: #{tpu_custom_call.1} parent=5 // pred_check
        %p685 = pneg %p684
      $region50: #{tpu_custom_call.1} parent=5 // pred_check_branch
        %687 = sbr.rel (%p685) target = $region52
      $region51: #{tpu_custom_call.1} parent=5 // pred_region
        %s688 = ssub.s32 %s16, 2
        // Predicated region
        $region53: #{tpu_custom_call.1} parent=51 // pred_check
          %p689 = pneg %p149
        $region54: #{tpu_custom_call.1} parent=51 // pred_check_branch
          %691 = sbr.rel (%p689) target = $region56
        $region55: #{tpu_custom_call.1} parent=51 // pred_region
          %s692 = sand.u32 %s134, 1
          %s693 = scalar_lea.sflag [#allocation4], %s692
          %s694 = sand.u32 %s134, 1
          %s695 = smul.addr %s694, 64
          %s696 = scalar_lea.vmem [#allocation8], %s695
          %698 = dma.done %s693, 1024
        $region56: #{tpu_custom_call.1} parent=51 // pred_fallthru
          _
      $region52: #{tpu_custom_call.1} parent=5 // pred_fallthru
        _
    $region6: #{tpu_custom_call.1} parent=1 // loop_footer
      %s20 = sadd.s32 1, %s16
    $region7: #{tpu_custom_call.1} parent=1 // loop_footer_branch
      %15 = sbr.rel target = $region3
    $region8: #{tpu_custom_call.1} parent=1 // loop_exit
      _
    %699 = vsyncpa [#allocation3], 1
    %s700 = scalar_lea.sflag [#allocation3], 1
    %701 = vsyncpa %s700, 1
    %702 = vsyncpa [#allocation6], 1
    %s703 = scalar_lea.sflag [#allocation6], 1
    %704 = vsyncpa %s703, 1
    %705 = vsyncpa [#allocation4], 1
    %s706 = scalar_lea.sflag [#allocation4], 1
    %707 = vsyncpa %s706, 1

</llo_original>
